<compile_context>
chip_gen: v5e
topology: v5e:2x2
jax: 0.10.0
libtpu: 0.0.40
codegen_flags: <defaults>
</compile_context>

<pallas_src>
import jax
import jax.numpy as jnp
from jax.experimental import pallas as pl
from jax.experimental.pallas import tpu as pltpu


def agent_forward_kernel(qt_rep_ref, vt_tile_ref, act_ref, opre_ref, onext_ref,
                         out_ref):
    """One grid step == TB timesteps.

    qt_rep_ref  : (o_size, s*s) f32, VMEM-resident. Column i*s+j holds Q[i, :].
    vt_tile_ref : (a_pad,  s*s) f32, VMEM-resident. Row a, column i*s+j holds V[j, a].
    act_ref     : (TB, 1) int32 action index per timestep.
    opre_ref    : (TB, o_size) f32.
    onext_ref   : (TB, o_size) f32.
    out_ref     : (TB, s*s) f32, lane-dense flattened (i, j) output.
    """
    tb = out_ref.shape[0]
    a_pad = vt_tile_ref.shape[0]

    # o_next - o_pre on the VPU.
    diff = onext_ref[...] - opre_ref[...]                               # (TB, o)

    # delta_wide[b, i*s + j] = (Q @ (o_next_b - o_pre_b))[i]
    # One MXU push whose result lands directly in the lane-dense output layout.
    delta_wide = jnp.dot(diff, qt_rep_ref[...],
                         preferred_element_type=jnp.float32)            # (TB, s*s)

    # In-kernel action gather: one-hot select against the resident V table.
    # vrow_wide[b, i*s + j] = V[j, action_b], again lane-dense from the MXU.
    onehot = (jax.lax.broadcasted_iota(jnp.int32, (tb, a_pad), 1)
              == act_ref[...]).astype(jnp.float32)                      # (TB, a_pad)
    vrow_wide = jnp.dot(onehot, vt_tile_ref[...],
                        preferred_element_type=jnp.float32)             # (TB, s*s)

    # Full-width VPU subtract + unmasked lane-dense store.
    out_ref[...] = delta_wide - vrow_wide


def _pick_block_timesteps(batch):
    """Timesteps per grid step.

    * batch <= 8: a single grid step (block dims == full array dims).
    * otherwise: a multiple of 8 (sublane rule), capped at 128, chosen so the
      grid has >= 2 steps (keeps both v7x TensorCores fed via the "parallel"
      batch axis).
    """
    if batch <= 8:
        return batch
    half = pl.cdiv(batch, 2)
    return int(min(128, max(8, (half // 8) * 8)))


def agent_forward_batched(Q, V, o_pre, o_next, actions, block_timesteps=None):
    """Batched Agent.forward.

    Q:       (s_dim, o_size) f32
    V:       (s_dim, a_size) f32
    o_pre:   (B, o_size) or (B, o_size, 1)
    o_next:  (B, o_size) or (B, o_size, 1)
    actions: (B,) int
    returns: (B, s_dim, s_dim) f32

    Note: out-of-range actions are clamped (PyTorch would raise).
    block_timesteps (if given) must be a multiple of 8 or equal to B.
    """
    Q = jnp.asarray(Q, jnp.float32)
    V = jnp.asarray(V, jnp.float32)
    s_dim, o_size = Q.shape
    a_size = V.shape[1]
    ss = s_dim * s_dim
    a_pad = ((a_size + 7) // 8) * 8   # pad the one-hot contraction to 8 sublanes

    actions = jnp.asarray(actions, jnp.int32).reshape(-1)
    batch = actions.shape[0]
    o_pre = jnp.asarray(o_pre, jnp.float32).reshape(batch, o_size)
    o_next = jnp.asarray(o_next, jnp.float32).reshape(batch, o_size)

    tb = _pick_block_timesteps(batch) if block_timesteps is None else int(block_timesteps)
    tb = min(tb, batch)
    n_steps = int(pl.cdiv(batch, tb))
    b_pad = n_steps * tb
    if b_pad != batch:
        pad = b_pad - batch
        o_pre = jnp.pad(o_pre, ((0, pad), (0, 0)))
        o_next = jnp.pad(o_next, ((0, pad), (0, 0)))
        actions = jnp.pad(actions, (0, pad))
    actions = jnp.clip(actions, 0, a_size - 1).reshape(b_pad, 1)

    # Lane-dense weight prep (tiny one-time XLA ops; both stay VMEM-resident):
    #   qt_rep[o, i*s + j]  = Q[i, o]   (each Q row replicated across the j lanes)
    #   vt_tile[a, i*s + j] = V[j, a]   (V^T tiled across the i groups; padded rows = 0)
    qt_rep = jnp.repeat(Q.T, s_dim, axis=1)                          # (o_size, s*s)
    vt_tile = jnp.pad(jnp.tile(V.T, (1, s_dim)),
                      ((0, a_pad - a_size), (0, 0)))                 # (a_pad, s*s)

    out_flat = pl.pallas_call(
        agent_forward_kernel,
        out_shape=jax.ShapeDtypeStruct((b_pad, ss), jnp.float32),
        grid_spec=pltpu.PrefetchScalarGridSpec(
            num_scalar_prefetch=0,
            grid=(n_steps,),
            in_specs=[
                # Constant index_map -> weight tables stay resident in VMEM.
                pl.BlockSpec((o_size, ss), lambda i: (0, 0)),
                pl.BlockSpec((a_pad, ss), lambda i: (0, 0)),
                # Per-block timestep data.
                pl.BlockSpec((tb, 1), lambda i: (i, 0)),
                pl.BlockSpec((tb, o_size), lambda i: (i, 0)),
                pl.BlockSpec((tb, o_size), lambda i: (i, 0)),
            ],
            out_specs=pl.BlockSpec((tb, ss), lambda i: (i, 0)),
        ),
        compiler_params=pltpu.CompilerParams(
            # Independent batch axis -> megacore-shardable on v7x.
            dimension_semantics=("parallel",),
        ),
    )(qt_rep, vt_tile, actions, o_pre, o_next)

    # (B, s*s) -> (B, s, s) is a free row-major reshape done outside the kernel.
    return out_flat[:batch].reshape(batch, s_dim, s_dim)


def agent_forward(Q, V, o_pre, o_next, action):
    """Single-step path matching Agent.forward(o_pre, action, o_next)."""
    out = agent_forward_batched(
        Q, V,
        jnp.asarray(o_pre, jnp.float32)[None],
        jnp.asarray(o_next, jnp.float32)[None],
        jnp.asarray([action], dtype=jnp.int32),
    )
    return out[0]


def _quantize(x, scale):
    # Snap test inputs to a coarse grid so every product/sum in both kernel and
    # reference is exact in f32 -> the numeric check is MXU-precision-agnostic.
    return jnp.round(x * scale) / scale


# TODO(synk): move_one_step / move_one_step_8 are host-side argmax policy
# helpers (Python prints, .item()) and are not part of forward; not ported.

if __name__ == "__main__":
    # Small shapes consistent with the module: o_size=16 observations,
    # a_size=4 actions, s_dim=32 hidden state dim, B=8 batched timesteps.
    o_size, a_size, s_dim, B = 16, 4, 32, 8

    key = jax.random.PRNGKey(0)
    k_q, k_v, k_pre, k_next, k_act = jax.random.split(key, 5)

    # Parameter init matching __init__ (Q = 1*randn, V = 0.1*randn).
    Q = _quantize(1.0 * jax.random.normal(k_q, (s_dim, o_size), jnp.float32), 16.0)
    V = _quantize(0.1 * jax.random.normal(k_v, (s_dim, a_size), jnp.float32), 64.0)

    o_pre_b = _quantize(jax.random.normal(k_pre, (B, o_size, 1), jnp.float32), 16.0)
    o_next_b = _quantize(jax.random.normal(k_next, (B, o_size, 1), jnp.float32), 16.0)
    actions = jax.random.randint(k_act, (B,), 0, a_size, dtype=jnp.int32)

    # Batched kernel (B=8 -> a single coarse grid step).
    out_b = jax.block_until_ready(
        agent_forward_batched(Q, V, o_pre_b, o_next_b, actions))
    ref_b = jnp.stack([
        Q @ o_next_b[b] - (Q @ o_pre_b[b] + V[:, int(actions[b])][None, :])
        for b in range(B)
    ])
    assert out_b.shape == (B, s_dim, s_dim)
    assert jnp.allclose(out_b, ref_b, atol=1e-5, rtol=1e-5), "batched mismatch"

    # Larger batch: exercises the multi-step (>=2 parallel grid steps) + padding path.
    B2 = 20
    k_pre2, k_next2, k_act2 = jax.random.split(jax.random.PRNGKey(1), 3)
    o_pre2 = _quantize(jax.random.normal(k_pre2, (B2, o_size), jnp.float32), 16.0)
    o_next2 = _quantize(jax.random.normal(k_next2, (B2, o_size), jnp.float32), 16.0)
    actions2 = jax.random.randint(k_act2, (B2,), 0, a_size, dtype=jnp.int32)
    out2 = jax.block_until_ready(
        agent_forward_batched(Q, V, o_pre2, o_next2, actions2))
    ref2 = jnp.stack([
        Q @ o_next2[b][:, None] - (Q @ o_pre2[b][:, None] + V[:, int(actions2[b])][None, :])
        for b in range(B2)
    ])
    assert out2.shape == (B2, s_dim, s_dim)
    assert jnp.allclose(out2, ref2, atol=1e-5, rtol=1e-5), "multi-step mismatch"

    # Single-step path (same call style as the PyTorch forward).
    out1 = jax.block_until_ready(
        agent_forward(Q, V, o_pre_b[0], o_next_b[0], int(actions[0])))
    ref1 = Q @ o_next_b[0] - (Q @ o_pre_b[0] + V[:, int(actions[0])][None, :])
    assert out1.shape == (s_dim, s_dim)
    assert jnp.allclose(out1, ref1, atol=1e-5, rtol=1e-5), "single-step mismatch"

    print("KERNEL_OK")
</pallas_src>

<mosaic_0001>
module attributes {stable_mosaic.version = 11 : i64} {
  func.func @agent_forward_kernel(%arg0: i32, %arg1: memref<16x1024xf32, #tpu.memory_space<vmem>>, %arg2: memref<8x1024xf32, #tpu.memory_space<vmem>>, %arg3: memref<8x1xi32, #tpu.memory_space<vmem>>, %arg4: memref<8x16xf32, #tpu.memory_space<vmem>>, %arg5: memref<8x16xf32, #tpu.memory_space<vmem>>, %arg6: memref<8x1024xf32, #tpu.memory_space<vmem>>) attributes {dimension_semantics = [#tpu.dimension_semantics<parallel>], iteration_bounds = array<i64: 1>, scalar_prefetch = 0 : i64, scratch_operands = 0 : i64, tpu.core_type = #tpu.core_type<tc>, window_params = [{pipeline_mode = #tpu.pipeline_mode<synchronous>, transform_indices = @transform_0, window_bounds = array<i64: 16, 1024>}, {pipeline_mode = #tpu.pipeline_mode<synchronous>, transform_indices = @transform_1, window_bounds = array<i64: 8, 1024>}, {transform_indices = @transform_2, window_bounds = array<i64: 8, 1>}, {transform_indices = @transform_3, window_bounds = array<i64: 8, 16>}, {transform_indices = @transform_4, window_bounds = array<i64: 8, 16>}, {transform_indices = @transform_5, window_bounds = array<i64: 8, 1024>}]} {
    %c0 = arith.constant 0 : index
    %c0_0 = arith.constant 0 : index
    %0 = vector.load %arg5[%c0, %c0_0] : memref<8x16xf32, #tpu.memory_space<vmem>>, vector<8x16xf32>
    %c0_1 = arith.constant 0 : index
    %c0_2 = arith.constant 0 : index
    %1 = vector.load %arg4[%c0_1, %c0_2] : memref<8x16xf32, #tpu.memory_space<vmem>>, vector<8x16xf32>
    %2 = arith.subf %0, %1 : vector<8x16xf32>
    %c0_3 = arith.constant 0 : index
    %c0_4 = arith.constant 0 : index
    %3 = vector.load %arg1[%c0_3, %c0_4] : memref<16x1024xf32, #tpu.memory_space<vmem>>, vector<16x1024xf32>
    %cst = arith.constant dense<0.000000e+00> : vector<8x1024xf32>
    %4 = tpu.matmul %2, %3, %cst {dimension_numbers = #tpu.dot_dimension_numbers<[1], [0], [0], [1], [0, 0, 1, 1], [], []>} : vector<8x16xf32>, vector<16x1024xf32>, vector<8x1024xf32> -> vector<8x1024xf32>
    %5 = tpu.iota {dimensions = array<i32: 1>} : vector<8x8xi32>
    %c0_5 = arith.constant 0 : index
    %c0_6 = arith.constant 0 : index
    %6 = vector.load %arg3[%c0_5, %c0_6] : memref<8x1xi32, #tpu.memory_space<vmem>>, vector<8x1xi32>
    %7 = vector.broadcast %6 : vector<8x1xi32> to vector<8x8xi32>
    %8 = arith.cmpi eq, %5, %7 : vector<8x8xi32>
    %9 = arith.extui %8 : vector<8x8xi1> to vector<8x8xi32>
    %10 = arith.sitofp %9 : vector<8x8xi32> to vector<8x8xf32>
    %c0_7 = arith.constant 0 : index
    %c0_8 = arith.constant 0 : index
    %11 = vector.load %arg2[%c0_7, %c0_8] : memref<8x1024xf32, #tpu.memory_space<vmem>>, vector<8x1024xf32>
    %cst_9 = arith.constant dense<0.000000e+00> : vector<8x1024xf32>
    %12 = tpu.matmul %10, %11, %cst_9 {dimension_numbers = #tpu.dot_dimension_numbers<[1], [0], [0], [1], [0, 0, 1, 1], [], []>} : vector<8x8xf32>, vector<8x1024xf32>, vector<8x1024xf32> -> vector<8x1024xf32>
    %13 = arith.subf %4, %12 : vector<8x1024xf32>
    %c0_10 = arith.constant 0 : index
    %c0_11 = arith.constant 0 : index
    %14 = vector.load %arg6[%c0_10, %c0_11] : memref<8x1024xf32, #tpu.memory_space<vmem>>, vector<8x1024xf32>
    tpu.vector_store %arg6[%c0_10, %c0_11], %13 {strides = array<i32>} : memref<8x1024xf32, #tpu.memory_space<vmem>>, vector<8x1024xf32>,
    return
  }
  func.func @transform_0(%arg0: i32) -> (i32, i32) {
    %c0_i32 = arith.constant 0 : i32
    %c0_i32_0 = arith.constant 0 : i32
    %c0_i32_1 = arith.constant 0 : i32
    return %c0_i32, %c0_i32_0 : i32, i32
  }
  func.func @transform_1(%arg0: i32) -> (i32, i32) {
    %c0_i32 = arith.constant 0 : i32
    %c0_i32_0 = arith.constant 0 : i32
    %c0_i32_1 = arith.constant 0 : i32
    return %c0_i32, %c0_i32_0 : i32, i32
  }
  func.func @transform_2(%arg0: i32) -> (i32, i32) {
    %c0_i32 = arith.constant 0 : i32
    %c0_i32_0 = arith.constant 0 : i32
    return %arg0, %c0_i32 : i32, i32
  }
  func.func @transform_3(%arg0: i32) -> (i32, i32) {
    %c0_i32 = arith.constant 0 : i32
    %c0_i32_0 = arith.constant 0 : i32
    return %arg0, %c0_i32 : i32, i32
  }
  func.func @transform_4(%arg0: i32) -> (i32, i32) {
    %c0_i32 = arith.constant 0 : i32
    %c0_i32_0 = arith.constant 0 : i32
    return %arg0, %c0_i32 : i32, i32
  }
  func.func @transform_5(%arg0: i32) -> (i32, i32) {
    %c0_i32 = arith.constant 0 : i32
    %c0_i32_0 = arith.constant 0 : i32
    return %arg0, %c0_i32 : i32, i32
  }
}

</mosaic_0001>

<llo_original>
// kernel: tpu_custom_call.1
$region0: #{tpu_custom_call.1}
  #allocation0 [shape = 'u32[]', space=smem, size = 0x4, offset = 0x4, fixed_abs, tag = 'smem constant byte address 0x4 - core index']
  #allocation1 [shape = 'u32[72,128]{1,0:T(1,128)}', space=vmem, size = 0x9000, scoped, tag = 'internal scratch']
  %s0 = inlined_call_operand.hbm [shape: f32[16,1024], index: 0, kind: input, shape index: {}]
  %s1 = inlined_call_operand.hbm [shape: f32[8,1024], index: 1, kind: input, shape index: {}]
  %s2 = inlined_call_operand.vmem [shape: s32[8,1], index: 2, kind: input, shape index: {}]
  %s3 = inlined_call_operand.vmem [shape: f32[8,16], index: 3, kind: input, shape index: {}]
  %s4 = inlined_call_operand.hbm [shape: f32[8,16], index: 4, kind: input, shape index: {}]
  %s5 = inlined_call_operand.hbm [shape: f32[8,1024], index: 5, kind: output, shape index: {}]
  %s6 = sld [smem:[#allocation0]]
  $region42: #{tpu_custom_call.1} parent=0
    _
  %s8 = ssub.s32 1, %s6
  %s9 = scalar_select 0, %s8, %s6
  $region1: #{tpu_custom_call.1} parent=0
    #allocation2 [shape = 'u8[65536]{0}', space=vmem, size = 0x10000, scoped, tag = 'input window, operand 0, single buffered']
    #allocation3 [shape = 's32[1]{0}', space=sflag, size = 0x4, scoped, tag = 'scoped memory for tpu_custom_call.1']
    #allocation4 [shape = 's32[1]{0}', space=sflag, size = 0x4, scoped, tag = 'scoped memory for tpu_custom_call.1']
    #allocation5 [shape = 'u8[32768]{0}', space=vmem, size = 0x8000, scoped, tag = 'input window, operand 1, single buffered']
    #allocation6 [shape = 's32[1]{0}', space=sflag, size = 0x4, scoped, tag = 'scoped memory for tpu_custom_call.1']
    #allocation7 [shape = 'u8[4096]{0}', space=vmem, size = 0x1000, scoped, tag = 'input window, operand 4, single buffered']
    #allocation8 [shape = 'u8[32768]{0}', space=vmem, size = 0x8000, scoped, tag = 'output window, operand 0, single buffered']
    %10 = vsyncpa [#allocation3], 0
    %11 = vsyncpa [#allocation6], 0
    %12 = vsyncpa [#allocation4], 0
    // Predicated region
    $region2: #{tpu_custom_call.1} parent=1 // pred_check
      _
    $region3: #{tpu_custom_call.1} parent=1 // pred_check_branch
      %14 = sbr.rel (0) target = $region5
    $region4: #{tpu_custom_call.1} parent=1 // pred_region
      %16 = vsyncadd [#allocation3], 0
      %s17 = sshll.u32 %s0, 4
      %s18 = int_to_ptr.hbm [resolvable:$true] %s17
      %s19 = sshll.u32 [#allocation2], 4
      %s20 = int_to_ptr.vmem [resolvable:$true] %s19
      %25 = dma.hbm_to_vmem [thread:$0]  %s18, 2048, %s20, [#allocation3], 1024, 1024, 64
    $region5: #{tpu_custom_call.1} parent=1 // pred_fallthru
      _
    // Predicated region
    $region6: #{tpu_custom_call.1} parent=1 // pred_check
      _
    $region7: #{tpu_custom_call.1} parent=1 // pred_check_branch
      %27 = sbr.rel (0) target = $region9
    $region8: #{tpu_custom_call.1} parent=1 // pred_region
      %29 = vsyncadd [#allocation6], 0
      %s31 = sshll.u32 %s1, 4
      %s32 = int_to_ptr.hbm [resolvable:$true] %s31
      %s33 = sshll.u32 [#allocation5], 4
      %s34 = int_to_ptr.vmem [resolvable:$true] %s33
      %36 = dma.hbm_to_vmem [thread:$0]  %s32, 1024, %s34, [#allocation6]
    $region9: #{tpu_custom_call.1} parent=1 // pred_fallthru
      _
    // Predicated region
    $region10: #{tpu_custom_call.1} parent=1 // pred_check
      _
    $region11: #{tpu_custom_call.1} parent=1 // pred_check_branch
      %38 = sbr.rel (0) target = $region13
    $region12: #{tpu_custom_call.1} parent=1 // pred_region
      _
    $region13: #{tpu_custom_call.1} parent=1 // pred_fallthru
      _
    // Predicated region
    $region14: #{tpu_custom_call.1} parent=1 // pred_check
      _
    $region15: #{tpu_custom_call.1} parent=1 // pred_check_branch
      %40 = sbr.rel (0) target = $region17
    $region16: #{tpu_custom_call.1} parent=1 // pred_region
      _
    $region17: #{tpu_custom_call.1} parent=1 // pred_fallthru
      _
    // Predicated region
    $region18: #{tpu_custom_call.1} parent=1 // pred_check
      _
    $region19: #{tpu_custom_call.1} parent=1 // pred_check_branch
      %42 = sbr.rel (0) target = $region21
    $region20: #{tpu_custom_call.1} parent=1 // pred_region
      %44 = vsyncadd [#allocation6], 0
      %s46 = sshll.u32 %s4, 4
      %s47 = int_to_ptr.hbm [resolvable:$true] %s46
      %s48 = sshll.u32 [#allocation7], 4
      %s49 = int_to_ptr.vmem [resolvable:$true] %s48
      %51 = dma.hbm_to_vmem [thread:$0]  %s47, 128, %s49, [#allocation6]
    $region21: #{tpu_custom_call.1} parent=1 // pred_fallthru
      _
    // Predicated region
    $region22: #{tpu_custom_call.1} parent=1 // pred_check
      _
    $region23: #{tpu_custom_call.1} parent=1 // pred_check_branch
      %53 = sbr.rel (0) target = $region25
    $region24: #{tpu_custom_call.1} parent=1 // pred_region
      %55 = dma.done [#allocation3], 2048
    $region25: #{tpu_custom_call.1} parent=1 // pred_fallthru
      _
    // Predicated region
    $region26: #{tpu_custom_call.1} parent=1 // pred_check
      _
    $region27: #{tpu_custom_call.1} parent=1 // pred_check_branch
      %57 = sbr.rel (0) target = $region29
    $region28: #{tpu_custom_call.1} parent=1 // pred_region
      %59 = dma.done [#allocation6], 1024
    $region29: #{tpu_custom_call.1} parent=1 // pred_fallthru
      _
    // Predicated region
    $region30: #{tpu_custom_call.1} parent=1 // pred_check
      _
    $region31: #{tpu_custom_call.1} parent=1 // pred_check_branch
      %61 = sbr.rel (0) target = $region33
    $region32: #{tpu_custom_call.1} parent=1 // pred_region
      %63 = dma.done [#allocation6], 128
    $region33: #{tpu_custom_call.1} parent=1 // pred_fallthru
      _
    %v64 = vld [vmem:[#allocation7] sm:$0xff]
    %v65 = vld [vmem:[%s3] sm:$0xff]
    %v66 = vsub.f32 %v64, %v65
    %v67 = vld [vmem:[#allocation2] sm:$0xff]
    %v68 = vld [vmem:[#allocation2 + $0x8] sm:$0xff]
    %v69 = vld [vmem:[#allocation2 + $0x10] sm:$0xff]
    %v70 = vld [vmem:[#allocation2 + $0x18] sm:$0xff]
    %v71 = vld [vmem:[#allocation2 + $0x20] sm:$0xff]
    %v72 = vld [vmem:[#allocation2 + $0x28] sm:$0xff]
    %v73 = vld [vmem:[#allocation2 + $0x30] sm:$0xff]
    %v74 = vld [vmem:[#allocation2 + $0x38] sm:$0xff]
    %v75 = vld [vmem:[#allocation2 + $0x40] sm:$0xff]
    %v76 = vld [vmem:[#allocation2 + $0x48] sm:$0xff]
    %v77 = vld [vmem:[#allocation2 + $0x50] sm:$0xff]
    %v78 = vld [vmem:[#allocation2 + $0x58] sm:$0xff]
    %v79 = vld [vmem:[#allocation2 + $0x60] sm:$0xff]
    %v80 = vld [vmem:[#allocation2 + $0x68] sm:$0xff]
    %v81 = vld [vmem:[#allocation2 + $0x70] sm:$0xff]
    %v82 = vld [vmem:[#allocation2 + $0x78] sm:$0xff]
    %vm83 = vcmask 130048
    %v85 = vsel %vm83, %v66, 0
    %87 = vmatpush.msra.mxu0 0.0
    %88 = vmatpush.msra.mxu0 0.0
    %89 = vmatpush.msra.mxu0 0.0
    %90 = vmatpush.msra.mxu0 0.0
    %91 = vmatpush.msra.mxu0 0.0
    %92 = vmatpush.msra.mxu0 0.0
    %93 = vmatpush.msra.mxu0 0.0
    %94 = vmatpush.msra.mxu0 0.0
    %95 = vmatpush.msra.mxu0 0.0
    %96 = vmatpush.msra.mxu0 0.0
    %97 = vmatpush.msra.mxu0 0.0
    %98 = vmatpush.msra.mxu0 0.0
    %99 = vmatpush.msra.mxu0 0.0
    %100 = vmatpush.msra.mxu0 0.0
    %101 = vmatpush.msra.mxu0 %v75
    %102 = vmatpush.msra.mxu0 %v67
    %103 = vmatmul.f32.gmra.mxu0 %v85
    %v104 = vpop.f32.mrf.mxu0
    %v105 = vadd.f32 0.0, %v104
    %106 = vdwg.mxu0
    %107 = vmatpush.msra.mxu0 0.0
    %108 = vmatpush.msra.mxu0 0.0
    %109 = vmatpush.msra.mxu0 0.0
    %110 = vmatpush.msra.mxu0 0.0
    %111 = vmatpush.msra.mxu0 0.0
    %112 = vmatpush.msra.mxu0 0.0
    %113 = vmatpush.msra.mxu0 0.0
    %114 = vmatpush.msra.mxu0 0.0
    %115 = vmatpush.msra.mxu0 0.0
    %116 = vmatpush.msra.mxu0 0.0
    %117 = vmatpush.msra.mxu0 0.0
    %118 = vmatpush.msra.mxu0 0.0
    %119 = vmatpush.msra.mxu0 0.0
    %120 = vmatpush.msra.mxu0 0.0
    %121 = vmatpush.msra.mxu0 %v76
    %122 = vmatpush.msra.mxu0 %v68
    %123 = vmatmul.f32.gmra.mxu0 %v85
    %v124 = vpop.f32.mrf.mxu0
    %v125 = vadd.f32 0.0, %v124
    %126 = vdwg.mxu0
    %127 = vmatpush.msra.mxu0 0.0
    %128 = vmatpush.msra.mxu0 0.0
    %129 = vmatpush.msra.mxu0 0.0
    %130 = vmatpush.msra.mxu0 0.0
    %131 = vmatpush.msra.mxu0 0.0
    %132 = vmatpush.msra.mxu0 0.0
    %133 = vmatpush.msra.mxu0 0.0
    %134 = vmatpush.msra.mxu0 0.0
    %135 = vmatpush.msra.mxu0 0.0
    %136 = vmatpush.msra.mxu0 0.0
    %137 = vmatpush.msra.mxu0 0.0
    %138 = vmatpush.msra.mxu0 0.0
    %139 = vmatpush.msra.mxu0 0.0
    %140 = vmatpush.msra.mxu0 0.0
    %141 = vmatpush.msra.mxu0 %v77
    %142 = vmatpush.msra.mxu0 %v69
    %143 = vmatmul.f32.gmra.mxu0 %v85
    %v144 = vpop.f32.mrf.mxu0
    %v145 = vadd.f32 0.0, %v144
    %146 = vdwg.mxu0
    %147 = vmatpush.msra.mxu0 0.0
    %148 = vmatpush.msra.mxu0 0.0
    %149 = vmatpush.msra.mxu0 0.0
    %150 = vmatpush.msra.mxu0 0.0
    %151 = vmatpush.msra.mxu0 0.0
    %152 = vmatpush.msra.mxu0 0.0
    %153 = vmatpush.msra.mxu0 0.0
    %154 = vmatpush.msra.mxu0 0.0
    %155 = vmatpush.msra.mxu0 0.0
    %156 = vmatpush.msra.mxu0 0.0
    %157 = vmatpush.msra.mxu0 0.0
    %158 = vmatpush.msra.mxu0 0.0
    %159 = vmatpush.msra.mxu0 0.0
    %160 = vmatpush.msra.mxu0 0.0
    %161 = vmatpush.msra.mxu0 %v78
    %162 = vmatpush.msra.mxu0 %v70
    %163 = vmatmul.f32.gmra.mxu0 %v85
    %v164 = vpop.f32.mrf.mxu0
    %v165 = vadd.f32 0.0, %v164
    %166 = vdwg.mxu0
    %167 = vmatpush.msra.mxu0 0.0
    %168 = vmatpush.msra.mxu0 0.0
    %169 = vmatpush.msra.mxu0 0.0
    %170 = vmatpush.msra.mxu0 0.0
    %171 = vmatpush.msra.mxu0 0.0
    %172 = vmatpush.msra.mxu0 0.0
    %173 = vmatpush.msra.mxu0 0.0
    %174 = vmatpush.msra.mxu0 0.0
    %175 = vmatpush.msra.mxu0 0.0
    %176 = vmatpush.msra.mxu0 0.0
    %177 = vmatpush.msra.mxu0 0.0
    %178 = vmatpush.msra.mxu0 0.0
    %179 = vmatpush.msra.mxu0 0.0
    %180 = vmatpush.msra.mxu0 0.0
    %181 = vmatpush.msra.mxu0 %v79
    %182 = vmatpush.msra.mxu0 %v71
    %183 = vmatmul.f32.gmra.mxu0 %v85
    %v184 = vpop.f32.mrf.mxu0
    %v185 = vadd.f32 0.0, %v184
    %186 = vdwg.mxu0
    %187 = vmatpush.msra.mxu0 0.0
    %188 = vmatpush.msra.mxu0 0.0
    %189 = vmatpush.msra.mxu0 0.0
    %190 = vmatpush.msra.mxu0 0.0
    %191 = vmatpush.msra.mxu0 0.0
    %192 = vmatpush.msra.mxu0 0.0
    %193 = vmatpush.msra.mxu0 0.0
    %194 = vmatpush.msra.mxu0 0.0
    %195 = vmatpush.msra.mxu0 0.0
    %196 = vmatpush.msra.mxu0 0.0
    %197 = vmatpush.msra.mxu0 0.0
    %198 = vmatpush.msra.mxu0 0.0
    %199 = vmatpush.msra.mxu0 0.0
    %200 = vmatpush.msra.mxu0 0.0
    %201 = vmatpush.msra.mxu0 %v80
    %202 = vmatpush.msra.mxu0 %v72
    %203 = vmatmul.f32.gmra.mxu0 %v85
    %v204 = vpop.f32.mrf.mxu0
    %v205 = vadd.f32 0.0, %v204
    %206 = vdwg.mxu0
    %207 = vmatpush.msra.mxu0 0.0
    %208 = vmatpush.msra.mxu0 0.0
    %209 = vmatpush.msra.mxu0 0.0
    %210 = vmatpush.msra.mxu0 0.0
    %211 = vmatpush.msra.mxu0 0.0
    %212 = vmatpush.msra.mxu0 0.0
    %213 = vmatpush.msra.mxu0 0.0
    %214 = vmatpush.msra.mxu0 0.0
    %215 = vmatpush.msra.mxu0 0.0
    %216 = vmatpush.msra.mxu0 0.0
    %217 = vmatpush.msra.mxu0 0.0
    %218 = vmatpush.msra.mxu0 0.0
    %219 = vmatpush.msra.mxu0 0.0
    %220 = vmatpush.msra.mxu0 0.0
    %221 = vmatpush.msra.mxu0 %v81
    %222 = vmatpush.msra.mxu0 %v73
    %223 = vmatmul.f32.gmra.mxu0 %v85
    %v224 = vpop.f32.mrf.mxu0
    %v225 = vadd.f32 0.0, %v224
    %226 = vdwg.mxu0
    %227 = vmatpush.msra.mxu0 0.0
    %228 = vmatpush.msra.mxu0 0.0
    %229 = vmatpush.msra.mxu0 0.0
    %230 = vmatpush.msra.mxu0 0.0
    %231 = vmatpush.msra.mxu0 0.0
    %232 = vmatpush.msra.mxu0 0.0
    %233 = vmatpush.msra.mxu0 0.0
    %234 = vmatpush.msra.mxu0 0.0
    %235 = vmatpush.msra.mxu0 0.0
    %236 = vmatpush.msra.mxu0 0.0
    %237 = vmatpush.msra.mxu0 0.0
    %238 = vmatpush.msra.mxu0 0.0
    %239 = vmatpush.msra.mxu0 0.0
    %240 = vmatpush.msra.mxu0 0.0
    %241 = vmatpush.msra.mxu0 %v82
    %242 = vmatpush.msra.mxu0 %v74
    %243 = vmatmul.f32.gmra.mxu0 %v85
    %v244 = vpop.f32.mrf.mxu0
    %v245 = vadd.f32 0.0, %v244
    %246 = vdwg.mxu0
    %v247 = vlaneseq
    %v248 = vand.u32 %v247, 127
    %v249 = vld [vmem:[%s2] sm:$0xff]
    %250 = vset.pattern.permute.xlu0 0
    %251 = vperm.xlu0 %250, %v249
    %v252 = vpop.permute.xlu0 %251
    %vm253 = vcmp.eq.s32.totalorder %v248, %v252
    %v254 = vsel %vm253, 1, 0
    %v255 = vcvt.s32.f32 %v254
    %v256 = vld [vmem:[#allocation5] sm:$0xff]
    %v257 = vld [vmem:[#allocation5 + $0x8] sm:$0xff]
    %v258 = vld [vmem:[#allocation5 + $0x10] sm:$0xff]
    %v259 = vld [vmem:[#allocation5 + $0x18] sm:$0xff]
    %v260 = vld [vmem:[#allocation5 + $0x20] sm:$0xff]
    %v261 = vld [vmem:[#allocation5 + $0x28] sm:$0xff]
    %v262 = vld [vmem:[#allocation5 + $0x30] sm:$0xff]
    %v263 = vld [vmem:[#allocation5 + $0x38] sm:$0xff]
    %vm264 = vcmask 64512
    %v266 = vsel %vm264, %v255, 0
    %268 = vmatpush.msra.mxu0 0.0
    %269 = vmatpush.msra.mxu0 0.0
    %270 = vmatpush.msra.mxu0 0.0
    %271 = vmatpush.msra.mxu0 0.0
    %272 = vmatpush.msra.mxu0 0.0
    %273 = vmatpush.msra.mxu0 0.0
    %274 = vmatpush.msra.mxu0 0.0
    %275 = vmatpush.msra.mxu0 0.0
    %276 = vmatpush.msra.mxu0 0.0
    %277 = vmatpush.msra.mxu0 0.0
    %278 = vmatpush.msra.mxu0 0.0
    %279 = vmatpush.msra.mxu0 0.0
    %280 = vmatpush.msra.mxu0 0.0
    %281 = vmatpush.msra.mxu0 0.0
    %282 = vmatpush.msra.mxu0 0.0
    %283 = vmatpush.msra.mxu0 %v256
    %284 = vmatmul.f32.gmra.mxu0 %v266
    %v285 = vpop.f32.mrf.mxu0
    %v286 = vadd.f32 0.0, %v285
    %287 = vdwg.mxu0
    %288 = vmatpush.msra.mxu0 0.0
    %289 = vmatpush.msra.mxu0 0.0
    %290 = vmatpush.msra.mxu0 0.0
    %291 = vmatpush.msra.mxu0 0.0
    %292 = vmatpush.msra.mxu0 0.0
    %293 = vmatpush.msra.mxu0 0.0
    %294 = vmatpush.msra.mxu0 0.0
    %295 = vmatpush.msra.mxu0 0.0
    %296 = vmatpush.msra.mxu0 0.0
    %297 = vmatpush.msra.mxu0 0.0
    %298 = vmatpush.msra.mxu0 0.0
    %299 = vmatpush.msra.mxu0 0.0
    %300 = vmatpush.msra.mxu0 0.0
    %301 = vmatpush.msra.mxu0 0.0
    %302 = vmatpush.msra.mxu0 0.0
    %303 = vmatpush.msra.mxu0 %v257
    %304 = vmatmul.f32.gmra.mxu0 %v266
    %v305 = vpop.f32.mrf.mxu0
    %v306 = vadd.f32 0.0, %v305
    %307 = vdwg.mxu0
    %308 = vmatpush.msra.mxu0 0.0
    %309 = vmatpush.msra.mxu0 0.0
    %310 = vmatpush.msra.mxu0 0.0
    %311 = vmatpush.msra.mxu0 0.0
    %312 = vmatpush.msra.mxu0 0.0
    %313 = vmatpush.msra.mxu0 0.0
    %314 = vmatpush.msra.mxu0 0.0
    %315 = vmatpush.msra.mxu0 0.0
    %316 = vmatpush.msra.mxu0 0.0
    %317 = vmatpush.msra.mxu0 0.0
    %318 = vmatpush.msra.mxu0 0.0
    %319 = vmatpush.msra.mxu0 0.0
    %320 = vmatpush.msra.mxu0 0.0
    %321 = vmatpush.msra.mxu0 0.0
    %322 = vmatpush.msra.mxu0 0.0
    %323 = vmatpush.msra.mxu0 %v258
    %324 = vmatmul.f32.gmra.mxu0 %v266
    %v325 = vpop.f32.mrf.mxu0
    %v326 = vadd.f32 0.0, %v325
    %327 = vdwg.mxu0
    %328 = vmatpush.msra.mxu0 0.0
    %329 = vmatpush.msra.mxu0 0.0
    %330 = vmatpush.msra.mxu0 0.0
    %331 = vmatpush.msra.mxu0 0.0
    %332 = vmatpush.msra.mxu0 0.0
    %333 = vmatpush.msra.mxu0 0.0
    %334 = vmatpush.msra.mxu0 0.0
    %335 = vmatpush.msra.mxu0 0.0
    %336 = vmatpush.msra.mxu0 0.0
    %337 = vmatpush.msra.mxu0 0.0
    %338 = vmatpush.msra.mxu0 0.0
    %339 = vmatpush.msra.mxu0 0.0
    %340 = vmatpush.msra.mxu0 0.0
    %341 = vmatpush.msra.mxu0 0.0
    %342 = vmatpush.msra.mxu0 0.0
    %343 = vmatpush.msra.mxu0 %v259
    %344 = vmatmul.f32.gmra.mxu0 %v266
    %v345 = vpop.f32.mrf.mxu0
    %v346 = vadd.f32 0.0, %v345
    %347 = vdwg.mxu0
    %348 = vmatpush.msra.mxu0 0.0
    %349 = vmatpush.msra.mxu0 0.0
    %350 = vmatpush.msra.mxu0 0.0
    %351 = vmatpush.msra.mxu0 0.0
    %352 = vmatpush.msra.mxu0 0.0
    %353 = vmatpush.msra.mxu0 0.0
    %354 = vmatpush.msra.mxu0 0.0
    %355 = vmatpush.msra.mxu0 0.0
    %356 = vmatpush.msra.mxu0 0.0
    %357 = vmatpush.msra.mxu0 0.0
    %358 = vmatpush.msra.mxu0 0.0
    %359 = vmatpush.msra.mxu0 0.0
    %360 = vmatpush.msra.mxu0 0.0
    %361 = vmatpush.msra.mxu0 0.0
    %362 = vmatpush.msra.mxu0 0.0
    %363 = vmatpush.msra.mxu0 %v260
    %364 = vmatmul.f32.gmra.mxu0 %v266
    %v365 = vpop.f32.mrf.mxu0
    %v366 = vadd.f32 0.0, %v365
    %367 = vdwg.mxu0
    %368 = vmatpush.msra.mxu0 0.0
    %369 = vmatpush.msra.mxu0 0.0
    %370 = vmatpush.msra.mxu0 0.0
    %371 = vmatpush.msra.mxu0 0.0
    %372 = vmatpush.msra.mxu0 0.0
    %373 = vmatpush.msra.mxu0 0.0
    %374 = vmatpush.msra.mxu0 0.0
    %375 = vmatpush.msra.mxu0 0.0
    %376 = vmatpush.msra.mxu0 0.0
    %377 = vmatpush.msra.mxu0 0.0
    %378 = vmatpush.msra.mxu0 0.0
    %379 = vmatpush.msra.mxu0 0.0
    %380 = vmatpush.msra.mxu0 0.0
    %381 = vmatpush.msra.mxu0 0.0
    %382 = vmatpush.msra.mxu0 0.0
    %383 = vmatpush.msra.mxu0 %v261
    %384 = vmatmul.f32.gmra.mxu0 %v266
    %v385 = vpop.f32.mrf.mxu0
    %v386 = vadd.f32 0.0, %v385
    %387 = vdwg.mxu0
    %388 = vmatpush.msra.mxu0 0.0
    %389 = vmatpush.msra.mxu0 0.0
    %390 = vmatpush.msra.mxu0 0.0
    %391 = vmatpush.msra.mxu0 0.0
    %392 = vmatpush.msra.mxu0 0.0
    %393 = vmatpush.msra.mxu0 0.0
    %394 = vmatpush.msra.mxu0 0.0
    %395 = vmatpush.msra.mxu0 0.0
    %396 = vmatpush.msra.mxu0 0.0
    %397 = vmatpush.msra.mxu0 0.0
    %398 = vmatpush.msra.mxu0 0.0
    %399 = vmatpush.msra.mxu0 0.0
    %400 = vmatpush.msra.mxu0 0.0
    %401 = vmatpush.msra.mxu0 0.0
    %402 = vmatpush.msra.mxu0 0.0
    %403 = vmatpush.msra.mxu0 %v262
    %404 = vmatmul.f32.gmra.mxu0 %v266
    %v405 = vpop.f32.mrf.mxu0
    %v406 = vadd.f32 0.0, %v405
    %407 = vdwg.mxu0
    %408 = vmatpush.msra.mxu0 0.0
    %409 = vmatpush.msra.mxu0 0.0
    %410 = vmatpush.msra.mxu0 0.0
    %411 = vmatpush.msra.mxu0 0.0
    %412 = vmatpush.msra.mxu0 0.0
    %413 = vmatpush.msra.mxu0 0.0
    %414 = vmatpush.msra.mxu0 0.0
    %415 = vmatpush.msra.mxu0 0.0
    %416 = vmatpush.msra.mxu0 0.0
    %417 = vmatpush.msra.mxu0 0.0
    %418 = vmatpush.msra.mxu0 0.0
    %419 = vmatpush.msra.mxu0 0.0
    %420 = vmatpush.msra.mxu0 0.0
    %421 = vmatpush.msra.mxu0 0.0
    %422 = vmatpush.msra.mxu0 0.0
    %423 = vmatpush.msra.mxu0 %v263
    %424 = vmatmul.f32.gmra.mxu0 %v266
    %v425 = vpop.f32.mrf.mxu0
    %v426 = vadd.f32 0.0, %v425
    %427 = vdwg.mxu0
    %v428 = vsub.f32 %v105, %v286
    %v429 = vsub.f32 %v125, %v306
    %v430 = vsub.f32 %v145, %v326
    %v431 = vsub.f32 %v165, %v346
    %v432 = vsub.f32 %v185, %v366
    %v433 = vsub.f32 %v205, %v386
    %v434 = vsub.f32 %v225, %v406
    %v435 = vsub.f32 %v245, %v426
    %436 = vst [vmem:[#allocation8] sm:$0xff] %v428
    %437 = vst [vmem:[#allocation8 + $0x8] sm:$0xff] %v429
    %438 = vst [vmem:[#allocation8 + $0x10] sm:$0xff] %v430
    %439 = vst [vmem:[#allocation8 + $0x18] sm:$0xff] %v431
    %440 = vst [vmem:[#allocation8 + $0x20] sm:$0xff] %v432
    %441 = vst [vmem:[#allocation8 + $0x28] sm:$0xff] %v433
    %442 = vst [vmem:[#allocation8 + $0x30] sm:$0xff] %v434
    %443 = vst [vmem:[#allocation8 + $0x38] sm:$0xff] %v435
    // Predicated region
    $region34: #{tpu_custom_call.1} parent=1 // pred_check
      _
    $region35: #{tpu_custom_call.1} parent=1 // pred_check_branch
      %445 = sbr.rel (0) target = $region37
    $region36: #{tpu_custom_call.1} parent=1 // pred_region
      %447 = vsyncadd [#allocation4], 0
      %s449 = sshll.u32 [#allocation8], 4
      %s450 = int_to_ptr.vmem [resolvable:$true] %s449
      %s451 = sshll.u32 %s5, 4
      %s452 = int_to_ptr.hbm [resolvable:$true] %s451
      %454 = dma.vmem_to_hbm [thread:$0]  %s450, 1024, %s452, [#allocation4]
    $region37: #{tpu_custom_call.1} parent=1 // pred_fallthru
      _
    // Predicated region
    $region38: #{tpu_custom_call.1} parent=1 // pred_check
      _
    $region39: #{tpu_custom_call.1} parent=1 // pred_check_branch
      %456 = sbr.rel (0) target = $region41
    $region40: #{tpu_custom_call.1} parent=1 // pred_region
      %458 = dma.done [#allocation4], 1024
    $region41: #{tpu_custom_call.1} parent=1 // pred_fallthru
      _
    %459 = vsyncpa [#allocation3], 1
    %460 = vsyncpa [#allocation6], 1
    %461 = vsyncpa [#allocation4], 1

</llo_original>
